<compile_context>
chip_gen: v5e
topology: v5e:2x2
jax: 0.10.0
libtpu: 0.0.40
codegen_flags: <defaults>
</compile_context>

<pallas_src>
import jax
import jax.numpy as jnp
from jax.experimental import pallas as pl
from jax.experimental.pallas import tpu as pltpu


# Folded rows per grid step.  With fold k = 4 this is 8192 original rows:
# x tile = out tile = 2048*128*4B = 1 MiB each, so the double-buffered working
# set is ~4 MiB + the tiny weight -- comfortably inside the default scoped-VMEM
# budget on v5e (16 MiB), v6e (32 MiB) and v7x (32 MiB).  Big enough that the
# ~0.35 us per-grid-step overhead is well hidden under ~1.5 us of DMA.
_TILE_R = 2048


def _linear_kernel(x_ref, w_ref, b_ref, o_ref):
    # x_ref: (TILE_R, K)   w_ref: (K, N)   b_ref: (1, N)   o_ref: (TILE_R, N)
    acc = jnp.dot(x_ref[...], w_ref[...], preferred_element_type=jnp.float32)
    o_ref[...] = (acc + b_ref[...].astype(jnp.float32)).astype(o_ref.dtype)


def value_encoder_forward(x, weight, bias):
    """ValueEncoder.forward: x @ weight.T + bias.

    x:      [..., ndv]
    weight: [nde, ndv]   (PyTorch nn.Linear convention)
    bias:   [nde]
    """
    ndv = x.shape[-1]
    nde = weight.shape[0]
    lead = x.shape[:-1]

    x2d = x.reshape(-1, ndv)
    M = x2d.shape[0]

    # Fold factor: pack k rows into one 128-lane-wide row when nde is narrow.
    k = 128 // nde if (nde < 128 and 128 % nde == 0) else 1

    # Folded row count, rounded up to the sublane rule (multiple of 8), then to
    # an exact multiple of the tile so every grid step is a full aligned tile.
    m_f_raw = -(-M // k)
    m_f_min = ((m_f_raw + 7) // 8) * 8
    tile_r = min(_TILE_R, m_f_min)                 # multiple of 8 by construction
    M_f = ((m_f_min + tile_r - 1) // tile_r) * tile_r
    M_pad = M_f * k
    if M_pad != M:
        x2d = jnp.pad(x2d, ((0, M_pad - M), (0, 0)))

    # Lane-dense folded view (row-major reshape: free).
    x_fold = x2d.reshape(M_f, k * ndv)

    # TODO(synk): in a real model precompute w_fold / b_fold once at parameter
    # init instead of per call (tiny here: <= 64 KiB, amortized over the stream).
    w_t = weight.T                                            # (ndv, nde)
    if k > 1:
        w_fold = jnp.kron(jnp.eye(k, dtype=w_t.dtype), w_t)   # (k*ndv, k*nde)
        b_fold = jnp.tile(bias, k).reshape(1, k * nde)
    else:
        w_fold = w_t
        b_fold = bias.reshape(1, nde)

    grid = (M_f // tile_r,)

    out_fold = pl.pallas_call(
        _linear_kernel,
        out_shape=jax.ShapeDtypeStruct((M_f, k * nde), x.dtype),
        grid=grid,
        in_specs=[
            pl.BlockSpec((tile_r, k * ndv), lambda i: (i, 0)),     # streamed
            pl.BlockSpec((k * ndv, k * nde), lambda i: (0, 0)),    # resident
            pl.BlockSpec((1, k * nde), lambda i: (0, 0)),          # resident
        ],
        out_specs=pl.BlockSpec((tile_r, k * nde), lambda i: (i, 0)),
        compiler_params=pltpu.CompilerParams(
            dimension_semantics=("parallel",),   # shard rows across TCs (v7x)
        ),
    )(x_fold, w_fold, b_fold)

    out = out_fold.reshape(M_pad, nde)[:M]       # free view + slice off pad
    return out.reshape(*lead, nde)


if __name__ == "__main__":
    # Small, deterministic setup consistent with ValueEncoder(ndv, nde).
    B, S, ndv, nde = 2, 8, 32, 32

    key = jax.random.PRNGKey(0)
    kx, kw, kb = jax.random.split(key, 3)

    x = jax.random.normal(kx, (B, S, ndv), dtype=jnp.float32)
    # Deterministic synthetic parameters (shapes match nn.Linear(ndv, nde)).
    weight = jax.random.normal(kw, (nde, ndv), dtype=jnp.float32) * 0.05
    bias = jax.random.normal(kb, (nde,), dtype=jnp.float32) * 0.05

    fwd = jax.jit(value_encoder_forward)
    out = jax.block_until_ready(fwd(x, weight, bias))

    # Reference check against plain-JAX linear.
    ref = x @ weight.T + bias
    assert out.shape == (B, S, nde), out.shape
    assert jnp.allclose(out, ref, atol=1e-5, rtol=1e-5), "mismatch vs reference"

    print("KERNEL_OK")
</pallas_src>

<mosaic_0001>
module attributes {stable_mosaic.version = 11 : i64} {
  func.func @_linear_kernel(%arg0: i32, %arg1: memref<8x128xf32, #tpu.memory_space<vmem>>, %arg2: memref<128x128xf32, #tpu.memory_space<vmem>>, %arg3: memref<1x128xf32, #tpu.memory_space<vmem>>, %arg4: memref<8x128xf32, #tpu.memory_space<vmem>>) attributes {dimension_semantics = [#tpu.dimension_semantics<parallel>], iteration_bounds = array<i64: 1>, scalar_prefetch = 0 : i64, scratch_operands = 0 : i64, tpu.core_type = #tpu.core_type<tc>, window_params = [{transform_indices = @transform_0, window_bounds = array<i64: 8, 128>}, {pipeline_mode = #tpu.pipeline_mode<synchronous>, transform_indices = @transform_1, window_bounds = array<i64: 128, 128>}, {pipeline_mode = #tpu.pipeline_mode<synchronous>, transform_indices = @transform_2, window_bounds = array<i64: 1, 128>}, {transform_indices = @transform_3, window_bounds = array<i64: 8, 128>}]} {
    %c0 = arith.constant 0 : index
    %c0_0 = arith.constant 0 : index
    %0 = vector.load %arg1[%c0, %c0_0] : memref<8x128xf32, #tpu.memory_space<vmem>>, vector<8x128xf32>
    %c0_1 = arith.constant 0 : index
    %c0_2 = arith.constant 0 : index
    %1 = vector.load %arg2[%c0_1, %c0_2] : memref<128x128xf32, #tpu.memory_space<vmem>>, vector<128x128xf32>
    %cst = arith.constant dense<0.000000e+00> : vector<8x128xf32>
    %2 = tpu.matmul %0, %1, %cst {dimension_numbers = #tpu.dot_dimension_numbers<[1], [0], [0], [1], [0, 0, 1, 1], [], []>} : vector<8x128xf32>, vector<128x128xf32>, vector<8x128xf32> -> vector<8x128xf32>
    %c0_3 = arith.constant 0 : index
    %c0_4 = arith.constant 0 : index
    %3 = vector.load %arg3[%c0_3, %c0_4] : memref<1x128xf32, #tpu.memory_space<vmem>>, vector<1x128xf32>
    %4 = vector.broadcast %3 : vector<1x128xf32> to vector<8x128xf32>
    %5 = arith.addf %2, %4 : vector<8x128xf32>
    %c0_5 = arith.constant 0 : index
    %c0_6 = arith.constant 0 : index
    %6 = vector.load %arg4[%c0_5, %c0_6] : memref<8x128xf32, #tpu.memory_space<vmem>>, vector<8x128xf32>
    tpu.vector_store %arg4[%c0_5, %c0_6], %5 {strides = array<i32>} : memref<8x128xf32, #tpu.memory_space<vmem>>, vector<8x128xf32>,
    return
  }
  func.func @transform_0(%arg0: i32) -> (i32, i32) {
    %c0_i32 = arith.constant 0 : i32
    %c0_i32_0 = arith.constant 0 : i32
    return %arg0, %c0_i32 : i32, i32
  }
  func.func @transform_1(%arg0: i32) -> (i32, i32) {
    %c0_i32 = arith.constant 0 : i32
    %c0_i32_0 = arith.constant 0 : i32
    %c0_i32_1 = arith.constant 0 : i32
    return %c0_i32, %c0_i32_0 : i32, i32
  }
  func.func @transform_2(%arg0: i32) -> (i32, i32) {
    %c0_i32 = arith.constant 0 : i32
    %c0_i32_0 = arith.constant 0 : i32
    %c0_i32_1 = arith.constant 0 : i32
    return %c0_i32, %c0_i32_0 : i32, i32
  }
  func.func @transform_3(%arg0: i32) -> (i32, i32) {
    %c0_i32 = arith.constant 0 : i32
    %c0_i32_0 = arith.constant 0 : i32
    return %arg0, %c0_i32 : i32, i32
  }
}

</mosaic_0001>

<llo_original>
// kernel: tile.8
$region0: #{tile.8}
  #allocation0 [shape = 's32[1]{0}', space=sflag, size = 0x4, scoped, tag = 'scoped memory for tile.8']
  %s0 = inlined_call_operand.vmem [shape: f32[32], index: 0, kind: input, shape index: {}]
  %s1 = inlined_call_operand.vmem [shape: f32[4,32], index: 1, kind: output, shape index: {}]
  // Predicated region
  $region2: #{tile.8} parent=0 // pred_check
    _
  $region3: #{tile.8} parent=0 // pred_check_branch
    %3 = sbr.rel (0) target = $region5
  $region4: #{tile.8} parent=0 // pred_region
    _
  $region5: #{tile.8} parent=0 // pred_fallthru
    _
  %v4 = vld [vmem:[%s0] ss:$0 sm:$0xff]
  %5 = vst [vmem:[%s1] sm:$0xf] %v4

// kernel: tile.9
$region0: #{tile.9}
  %s0 = inlined_call_operand.vmem [shape: f32[4,32], index: 0, kind: input, shape index: {}]
  %s1 = inlined_call_operand.vmem [shape: f32[1,128], index: 1, kind: output, shape index: {}]
  $region1: #{tile.9} parent=0
    #allocation0 [shape = 'u8[4096]{0}', space=vmem, size = 0x1000, scoped, tag = 'scoped mem for output reshape']
    #allocation1 [shape = 'u8[4096]{0}', space=vmem, size = 0x1000, scoped, tag = 'scoped mem for input reshape']
    %s3 = ssub.s32 16, 1
    %v4 = vld [vmem:[%s0] sm:%s3]
    %5 = vst [vmem:[#allocation1] sm:%s3] %v4
    %v6 = vld [vmem:[#allocation1] sm:$0x1]
    %vm7 = vcmask 261120
    %8 = vst.msk [vmem:[#allocation0] sm:$0x1] %vm7, %v6
    %s9 = scalar_lea.vmem [#allocation1], 3
    %v10 = vld [vmem:[%s9] sm:$0x1]
    %11 = vrot.lane.b32.xlu0 %v10, 96
    %v12 = vpop.permute.xlu0 %11
    %vm13 = vcmask 1048320
    %14 = vst.msk [vmem:[#allocation0] sm:$0x1] %vm13, %v12
    %s15 = scalar_lea.vmem [#allocation1], 2
    %v16 = vld [vmem:[%s15] sm:$0x1]
    %17 = vrot.lane.b32.xlu0 %v16, 64
    %v18 = vpop.permute.xlu0 %17
    %vm19 = vcmask 785920
    %20 = vst.msk [vmem:[#allocation0] sm:$0x1] %vm19, %v18
    %s21 = scalar_lea.vmem [#allocation1], 1
    %v22 = vld [vmem:[%s21] sm:$0x1]
    %23 = vrot.lane.b32.xlu0 %v22, 32
    %v24 = vpop.permute.xlu0 %23
    %vm25 = vcmask 523520
    %26 = vst.msk [vmem:[#allocation0] sm:$0x1] %vm25, %v24
    %s28 = ssub.s32 2, 1
    %v29 = vld [vmem:[#allocation0] sm:%s28]
    %s31 = ssub.s32 2, 1
    %32 = vst [vmem:[%s1] sm:%s31] %v29

// kernel: value_encoder_forward.1
$region0: #{value_encoder_forward.1}
  #allocation0 [shape = 'u32[]', space=smem, size = 0x4, offset = 0x4, fixed_abs, tag = 'smem constant byte address 0x4 - core index']
  #allocation1 [shape = 'u32[72,128]{1,0:T(1,128)}', space=vmem, size = 0x9000, scoped, tag = 'internal scratch']
  %s0 = inlined_call_operand.vmem [shape: f32[8,128], index: 0, kind: input, shape index: {}]
  %s1 = inlined_call_operand.vmem [shape: f32[128,128], index: 1, kind: input, shape index: {}]
  %s2 = inlined_call_operand.vmem [shape: f32[1,128], index: 2, kind: input, shape index: {}]
  %s3 = inlined_call_operand.vmem [shape: f32[8,128], index: 3, kind: output, shape index: {}]
  %s4 = sld [smem:[#allocation0]]
  $region22: #{value_encoder_forward.1} parent=0
    _
  %s6 = ssub.s32 1, %s4
  %s7 = scalar_select 0, %s6, %s4
  // Predicated region
  $region2: #{value_encoder_forward.1} parent=0 // pred_check
    _
  $region3: #{value_encoder_forward.1} parent=0 // pred_check_branch
    %9 = sbr.rel (0) target = $region5
  $region4: #{value_encoder_forward.1} parent=0 // pred_region
    _
  $region5: #{value_encoder_forward.1} parent=0 // pred_fallthru
    _
  // Predicated region
  $region6: #{value_encoder_forward.1} parent=0 // pred_check
    _
  $region7: #{value_encoder_forward.1} parent=0 // pred_check_branch
    %11 = sbr.rel (0) target = $region9
  $region8: #{value_encoder_forward.1} parent=0 // pred_region
    _
  $region9: #{value_encoder_forward.1} parent=0 // pred_fallthru
    _
  // Predicated region
  $region10: #{value_encoder_forward.1} parent=0 // pred_check
    _
  $region11: #{value_encoder_forward.1} parent=0 // pred_check_branch
    %13 = sbr.rel (0) target = $region13
  $region12: #{value_encoder_forward.1} parent=0 // pred_region
    _
  $region13: #{value_encoder_forward.1} parent=0 // pred_fallthru
    _
  %v14 = vld [vmem:[%s0] sm:$0xff]
  %v15 = vld [vmem:[%s1] sm:$0xff]
  %v16 = vld [vmem:[%s1 + $0x8] sm:$0xff]
  %v17 = vld [vmem:[%s1 + $0x10] sm:$0xff]
  %v18 = vld [vmem:[%s1 + $0x18] sm:$0xff]
  %v19 = vld [vmem:[%s1 + $0x20] sm:$0xff]
  %v20 = vld [vmem:[%s1 + $0x28] sm:$0xff]
  %v21 = vld [vmem:[%s1 + $0x30] sm:$0xff]
  %v22 = vld [vmem:[%s1 + $0x38] sm:$0xff]
  %v23 = vld [vmem:[%s1 + $0x40] sm:$0xff]
  %v24 = vld [vmem:[%s1 + $0x48] sm:$0xff]
  %v25 = vld [vmem:[%s1 + $0x50] sm:$0xff]
  %v26 = vld [vmem:[%s1 + $0x58] sm:$0xff]
  %v27 = vld [vmem:[%s1 + $0x60] sm:$0xff]
  %v28 = vld [vmem:[%s1 + $0x68] sm:$0xff]
  %v29 = vld [vmem:[%s1 + $0x70] sm:$0xff]
  %v30 = vld [vmem:[%s1 + $0x78] sm:$0xff]
  %v31 = vld [vmem:[%s2] sm:$0x1]
  %v33 = vperm.slane %v31, 0
  %35 = vmatpush.msra.mxu0 %v30
  %36 = vmatpush.msra.mxu0 %v29
  %37 = vmatpush.msra.mxu0 %v28
  %38 = vmatpush.msra.mxu0 %v27
  %39 = vmatpush.msra.mxu0 %v26
  %40 = vmatpush.msra.mxu0 %v25
  %41 = vmatpush.msra.mxu0 %v24
  %42 = vmatpush.msra.mxu0 %v23
  %43 = vmatpush.msra.mxu0 %v22
  %44 = vmatpush.msra.mxu0 %v21
  %45 = vmatpush.msra.mxu0 %v20
  %46 = vmatpush.msra.mxu0 %v19
  %47 = vmatpush.msra.mxu0 %v18
  %48 = vmatpush.msra.mxu0 %v17
  %49 = vmatpush.msra.mxu0 %v16
  %50 = vmatpush.msra.mxu0 %v15
  %51 = vmatmul.f32.gmra.mxu0 %v14
  %v52 = vpop.f32.mrf.mxu0
  %v53 = vadd.f32 %v33, %v52
  %54 = vdwg.mxu0
  %55 = vst [vmem:[%s3] sm:$0xff] %v53
  // Predicated region
  $region14: #{value_encoder_forward.1} parent=0 // pred_check
    _
  $region15: #{value_encoder_forward.1} parent=0 // pred_check_branch
    %57 = sbr.rel (0) target = $region17
  $region16: #{value_encoder_forward.1} parent=0 // pred_region
    _
  $region17: #{value_encoder_forward.1} parent=0 // pred_fallthru
    _
  // Predicated region
  $region18: #{value_encoder_forward.1} parent=0 // pred_check
    _
  $region19: #{value_encoder_forward.1} parent=0 // pred_check_branch
    %59 = sbr.rel (0) target = $region21
  $region20: #{value_encoder_forward.1} parent=0 // pred_region
    _
  $region21: #{value_encoder_forward.1} parent=0 // pred_fallthru
    _

</llo_original>
